<compile_context>
chip_gen: v5e
topology: v5e:2x2
jax: 0.10.0
libtpu: 0.0.40
codegen_flags: <defaults>
</compile_context>

<pallas_src>
import jax
import jax.numpy as jnp
from jax.experimental import pallas as pl
from jax.experimental.pallas import tpu as pltpu

DELTA_T = 0.04
FORWARD_REWARD_WEIGHT = 1.0   # Swimmer-v3 default
CTRL_COST_WEIGHT = 1e-4       # Swimmer-v3 default

# Velocity scale folded with the forward-reward weight (exact in f32: 25.0).
_VEL_SCALE = FORWARD_REWARD_WEIGHT / DELTA_T

# Default lane-tile over the batch. Multiple of 128; small enough to be far
# below the v7x 64 MiB VMEM budget even double-buffered, big enough to
# amortize the ~0.35 us per-grid-step overhead.
_DEFAULT_BT = 8192


def _round_up(x: int, m: int) -> int:
    return ((x + m - 1) // m) * m


def _swimmer_reward_kernel(x_now_ref, act_ref, x_next_ref, out_ref):
    # x_now_ref / x_next_ref: (1, BT)   act_ref: (ACT_DIM, BT)   out_ref: (1, BT)
    forward_reward = (x_next_ref[...] - x_now_ref[...]) * _VEL_SCALE

    act = act_ref[...]                      # (ACT_DIM, BT)
    # Unrolled sublane-axis sum of squares (ACT_DIM is tiny, e.g. 2) — pure VPU.
    ctrl = act[0:1, :] * act[0:1, :]
    for j in range(1, act.shape[0]):
        ctrl = ctrl + act[j:j + 1, :] * act[j:j + 1, :]

    out_ref[...] = forward_reward - CTRL_COST_WEIGHT * ctrl


def swimmer_reward(state, action, next_state, *, bt: int = _DEFAULT_BT):
    """state: (B, OBS_DIM), action: (B, ACT_DIM), next_state: (B, OBS_DIM).
    Returns reward: (B,) float32."""
    b, _ = state.shape
    _, act_dim = action.shape

    # Lane tile: multiple of 128, no larger than needed for this batch.
    b128 = _round_up(b, 128)
    bt = min(bt, b128)
    b_pad = _round_up(b, bt)
    grid = (b_pad // bt,)

    # Wrapper-side layout plumbing: slim inputs (only the x column) and put
    # the batch on the lane axis. Padded tail is zero -> padded outputs are
    # finite garbage-free zeros that get sliced off below.
    x_now = jnp.zeros((1, b_pad), jnp.float32).at[0, :b].set(
        state[:, 0].astype(jnp.float32))
    x_next = jnp.zeros((1, b_pad), jnp.float32).at[0, :b].set(
        next_state[:, 0].astype(jnp.float32))
    act_t = jnp.zeros((act_dim, b_pad), jnp.float32).at[:, :b].set(
        action.T.astype(jnp.float32))

    out = pl.pallas_call(
        _swimmer_reward_kernel,
        out_shape=jax.ShapeDtypeStruct((1, b_pad), jnp.float32),
        grid=grid,
        in_specs=[
            pl.BlockSpec((1, bt), lambda i: (0, i)),         # x_now
            pl.BlockSpec((act_dim, bt), lambda i: (0, i)),   # action (ACT_DIM, B)
            pl.BlockSpec((1, bt), lambda i: (0, i)),         # x_next
        ],
        out_specs=pl.BlockSpec((1, bt), lambda i: (0, i)),
        compiler_params=pltpu.CompilerParams(
            dimension_semantics=("parallel",)),
    )(x_now, act_t, x_next)

    return out[0, :b]


def swimmer_reward_ref(state, action, next_state):
    x_velocity = (next_state[..., 0] - state[..., 0]) / DELTA_T
    forward_reward = FORWARD_REWARD_WEIGHT * x_velocity
    ctrl_cost = CTRL_COST_WEIGHT * jnp.sum(jnp.square(action), axis=-1)
    return forward_reward - ctrl_cost


if __name__ == "__main__":
    key = jax.random.PRNGKey(0)
    k1, k2, k3 = jax.random.split(key, 3)

    batch = 8
    obs_dim = 10   # Swimmer-v3 obs with x/y positions included
    act_dim = 2    # Swimmer-v3 action dim

    state = jax.random.normal(k1, (batch, obs_dim), dtype=jnp.float32)
    next_state = jax.random.normal(k2, (batch, obs_dim), dtype=jnp.float32)
    action = jax.random.normal(k3, (batch, act_dim), dtype=jnp.float32)

    out = swimmer_reward(state, action, next_state)
    jax.block_until_ready(out)

    ref = swimmer_reward_ref(state, action, next_state)
    assert out.shape == (batch,)
    assert jnp.allclose(out, ref, atol=1e-5, rtol=1e-5)

    print("KERNEL_OK")
</pallas_src>

<mosaic_0001>
module attributes {stable_mosaic.version = 11 : i64} {
  func.func @_swimmer_reward_kernel(%arg0: i32, %arg1: memref<1x128xf32, #tpu.memory_space<vmem>>, %arg2: memref<2x128xf32, #tpu.memory_space<vmem>>, %arg3: memref<1x128xf32, #tpu.memory_space<vmem>>, %arg4: memref<1x128xf32, #tpu.memory_space<vmem>>) attributes {dimension_semantics = [#tpu.dimension_semantics<parallel>], iteration_bounds = array<i64: 1>, scalar_prefetch = 0 : i64, scratch_operands = 0 : i64, tpu.core_type = #tpu.core_type<tc>, window_params = [{transform_indices = @transform_0, window_bounds = array<i64: 1, 128>}, {transform_indices = @transform_1, window_bounds = array<i64: 2, 128>}, {transform_indices = @transform_2, window_bounds = array<i64: 1, 128>}, {transform_indices = @transform_3, window_bounds = array<i64: 1, 128>}]} {
    %c0 = arith.constant 0 : index
    %c0_0 = arith.constant 0 : index
    %0 = vector.load %arg3[%c0, %c0_0] : memref<1x128xf32, #tpu.memory_space<vmem>>, vector<1x128xf32>
    %c0_1 = arith.constant 0 : index
    %c0_2 = arith.constant 0 : index
    %1 = vector.load %arg1[%c0_1, %c0_2] : memref<1x128xf32, #tpu.memory_space<vmem>>, vector<1x128xf32>
    %2 = arith.subf %0, %1 : vector<1x128xf32>
    %cst = arith.constant 2.500000e+01 : f32
    %3 = vector.broadcast %cst : f32 to vector<1x128xf32>
    %4 = arith.mulf %2, %3 : vector<1x128xf32>
    %c0_3 = arith.constant 0 : index
    %c0_4 = arith.constant 0 : index
    %5 = vector.load %arg2[%c0_3, %c0_4] : memref<2x128xf32, #tpu.memory_space<vmem>>, vector<2x128xf32>
    %6 = vector.extract_strided_slice %5 {offsets = [0, 0], sizes = [1, 128], strides = [1, 1]} : vector<2x128xf32> to vector<1x128xf32>
    %7 = vector.extract_strided_slice %5 {offsets = [0, 0], sizes = [1, 128], strides = [1, 1]} : vector<2x128xf32> to vector<1x128xf32>
    %8 = arith.mulf %6, %7 : vector<1x128xf32>
    %9 = vector.extract_strided_slice %5 {offsets = [1, 0], sizes = [1, 128], strides = [1, 1]} : vector<2x128xf32> to vector<1x128xf32>
    %10 = vector.extract_strided_slice %5 {offsets = [1, 0], sizes = [1, 128], strides = [1, 1]} : vector<2x128xf32> to vector<1x128xf32>
    %11 = arith.mulf %9, %10 : vector<1x128xf32>
    %12 = arith.addf %8, %11 : vector<1x128xf32>
    %cst_5 = arith.constant 9.99999974E-5 : f32
    %13 = vector.broadcast %cst_5 : f32 to vector<1x128xf32>
    %14 = arith.mulf %13, %12 : vector<1x128xf32>
    %15 = arith.subf %4, %14 : vector<1x128xf32>
    %c0_6 = arith.constant 0 : index
    %c0_7 = arith.constant 0 : index
    %16 = vector.load %arg4[%c0_6, %c0_7] : memref<1x128xf32, #tpu.memory_space<vmem>>, vector<1x128xf32>
    tpu.vector_store %arg4[%c0_6, %c0_7], %15 {strides = array<i32>} : memref<1x128xf32, #tpu.memory_space<vmem>>, vector<1x128xf32>,
    return
  }
  func.func @transform_0(%arg0: i32) -> (i32, i32) {
    %c0_i32 = arith.constant 0 : i32
    %c0_i32_0 = arith.constant 0 : i32
    return %c0_i32, %arg0 : i32, i32
  }
  func.func @transform_1(%arg0: i32) -> (i32, i32) {
    %c0_i32 = arith.constant 0 : i32
    %c0_i32_0 = arith.constant 0 : i32
    return %c0_i32, %arg0 : i32, i32
  }
  func.func @transform_2(%arg0: i32) -> (i32, i32) {
    %c0_i32 = arith.constant 0 : i32
    %c0_i32_0 = arith.constant 0 : i32
    return %c0_i32, %arg0 : i32, i32
  }
  func.func @transform_3(%arg0: i32) -> (i32, i32) {
    %c0_i32 = arith.constant 0 : i32
    %c0_i32_0 = arith.constant 0 : i32
    return %c0_i32, %arg0 : i32, i32
  }
}

</mosaic_0001>

<llo_original>
// kernel: tpu_custom_call.1
$region0: #{tpu_custom_call.1}
  #allocation0 [shape = 'u32[]', space=smem, size = 0x4, offset = 0x4, fixed_abs, tag = 'smem constant byte address 0x4 - core index']
  #allocation1 [shape = 'u32[72,128]{1,0:T(1,128)}', space=vmem, size = 0x9000, scoped, tag = 'internal scratch']
  %s0 = inlined_call_operand.hbm [shape: f32[1,128], index: 0, kind: input, shape index: {}]
  %s1 = inlined_call_operand.hbm [shape: f32[2,128], index: 1, kind: input, shape index: {}]
  %s2 = inlined_call_operand.vmem [shape: f32[1,128], index: 2, kind: input, shape index: {}]
  %s3 = inlined_call_operand.hbm [shape: f32[1,128], index: 3, kind: output, shape index: {}]
  %s4 = sld [smem:[#allocation0]]
  $region30: #{tpu_custom_call.1} parent=0
    _
  %s6 = ssub.s32 1, %s4
  %s7 = scalar_select 0, %s6, %s4
  $region1: #{tpu_custom_call.1} parent=0
    #allocation2 [shape = 'u8[512]{0}', space=vmem, size = 0x400, scoped, tag = 'input window, operand 0, single buffered']
    #allocation3 [shape = 's32[1]{0}', space=sflag, size = 0x4, scoped, tag = 'scoped memory for tpu_custom_call.1']
    #allocation4 [shape = 's32[1]{0}', space=sflag, size = 0x4, scoped, tag = 'scoped memory for tpu_custom_call.1']
    #allocation5 [shape = 'u8[1024]{0}', space=vmem, size = 0x400, scoped, tag = 'input window, operand 1, single buffered']
    #allocation6 [shape = 's32[1]{0}', space=sflag, size = 0x4, scoped, tag = 'scoped memory for tpu_custom_call.1']
    #allocation7 [shape = 'u8[512]{0}', space=vmem, size = 0x400, scoped, tag = 'output window, operand 0, single buffered']
    %8 = vsyncpa [#allocation3], 0
    %9 = vsyncpa [#allocation6], 0
    %10 = vsyncpa [#allocation4], 0
    // Predicated region
    $region2: #{tpu_custom_call.1} parent=1 // pred_check
      _
    $region3: #{tpu_custom_call.1} parent=1 // pred_check_branch
      %12 = sbr.rel (0) target = $region5
    $region4: #{tpu_custom_call.1} parent=1 // pred_region
      %14 = vsyncadd [#allocation3], 0
      %s16 = sshll.u32 %s0, 4
      %s17 = int_to_ptr.hbm [resolvable:$true] %s16
      %s18 = sshll.u32 [#allocation2], 4
      %s19 = int_to_ptr.vmem [resolvable:$true] %s18
      %21 = dma.hbm_to_vmem [thread:$0]  %s17, 16, %s19, [#allocation3]
    $region5: #{tpu_custom_call.1} parent=1 // pred_fallthru
      _
    // Predicated region
    $region6: #{tpu_custom_call.1} parent=1 // pred_check
      _
    $region7: #{tpu_custom_call.1} parent=1 // pred_check_branch
      %23 = sbr.rel (0) target = $region9
    $region8: #{tpu_custom_call.1} parent=1 // pred_region
      %25 = vsyncadd [#allocation6], 0
      %s27 = sshll.u32 %s1, 4
      %s28 = int_to_ptr.hbm [resolvable:$true] %s27
      %s29 = sshll.u32 [#allocation5], 4
      %s30 = int_to_ptr.vmem [resolvable:$true] %s29
      %32 = dma.hbm_to_vmem [thread:$0]  %s28, 32, %s30, [#allocation6]
    $region9: #{tpu_custom_call.1} parent=1 // pred_fallthru
      _
    // Predicated region
    $region10: #{tpu_custom_call.1} parent=1 // pred_check
      _
    $region11: #{tpu_custom_call.1} parent=1 // pred_check_branch
      %34 = sbr.rel (0) target = $region13
    $region12: #{tpu_custom_call.1} parent=1 // pred_region
      _
    $region13: #{tpu_custom_call.1} parent=1 // pred_fallthru
      _
    // Predicated region
    $region14: #{tpu_custom_call.1} parent=1 // pred_check
      _
    $region15: #{tpu_custom_call.1} parent=1 // pred_check_branch
      %36 = sbr.rel (0) target = $region17
    $region16: #{tpu_custom_call.1} parent=1 // pred_region
      %38 = dma.done [#allocation3], 16
    $region17: #{tpu_custom_call.1} parent=1 // pred_fallthru
      _
    // Predicated region
    $region18: #{tpu_custom_call.1} parent=1 // pred_check
      _
    $region19: #{tpu_custom_call.1} parent=1 // pred_check_branch
      %40 = sbr.rel (0) target = $region21
    $region20: #{tpu_custom_call.1} parent=1 // pred_region
      %42 = dma.done [#allocation6], 32
    $region21: #{tpu_custom_call.1} parent=1 // pred_fallthru
      _
    %v43 = vld [vmem:[%s2] sm:$0x1]
    %v44 = vld [vmem:[#allocation2] sm:$0x1]
    %v45 = vsub.f32 %v43, %v44
    %v46 = vmul.f32 %v45, 25.0
    %v47 = vld [vmem:[#allocation5] sm:$0x3]
    %v48 = vmul.f32 %v47, %v47
    %v50 = vrot.slane %v48, 1
    %v52 = vadd.f32 %v48, %v50
    %v53 = vmul.f32 %v52, 0.0001
    %v54 = vsub.f32 %v46, %v53
    %55 = vst [vmem:[#allocation7] sm:$0x1] %v54
    // Predicated region
    $region22: #{tpu_custom_call.1} parent=1 // pred_check
      _
    $region23: #{tpu_custom_call.1} parent=1 // pred_check_branch
      %57 = sbr.rel (0) target = $region25
    $region24: #{tpu_custom_call.1} parent=1 // pred_region
      %59 = vsyncadd [#allocation4], 0
      %s61 = sshll.u32 [#allocation7], 4
      %s62 = int_to_ptr.vmem [resolvable:$true] %s61
      %s63 = sshll.u32 %s3, 4
      %s64 = int_to_ptr.hbm [resolvable:$true] %s63
      %66 = dma.vmem_to_hbm [thread:$0]  %s62, 16, %s64, [#allocation4]
    $region25: #{tpu_custom_call.1} parent=1 // pred_fallthru
      _
    // Predicated region
    $region26: #{tpu_custom_call.1} parent=1 // pred_check
      _
    $region27: #{tpu_custom_call.1} parent=1 // pred_check_branch
      %68 = sbr.rel (0) target = $region29
    $region28: #{tpu_custom_call.1} parent=1 // pred_region
      %70 = dma.done [#allocation4], 16
    $region29: #{tpu_custom_call.1} parent=1 // pred_fallthru
      _
    %71 = vsyncpa [#allocation3], 1
    %72 = vsyncpa [#allocation6], 1
    %73 = vsyncpa [#allocation4], 1

</llo_original>
